<compile_context>
chip_gen: v7x
topology: tpu7x:2x2x1
jax: 0.10.0
libtpu: 0.0.40
codegen_flags: <defaults>
</compile_context>

<pallas_src>
import math

import jax
import jax.numpy as jnp
from jax.experimental import pallas as pl
from jax.experimental.pallas import tpu as pltpu

_EPS = 1e-12  # matches torch.nn.functional.normalize default eps


def _ceil_to(x, m):
    return ((x + m - 1) // m) * m


def _pad2(x, rows, cols):
    return jnp.pad(x, ((0, rows - x.shape[0]), (0, cols - x.shape[1])))


def _l2_normalize_f32(x):
    # F.normalize(x, dim=-1) == x / max(||x||, eps) == x * rsqrt(max(||x||^2, eps^2))
    # Must stay f32: zero-padded rows rely on 0 * rsqrt(eps^2) == 0 staying finite.
    x = x.astype(jnp.float32)
    norm_sq = jnp.sum(x * x, axis=-1, keepdims=True)
    return x * jax.lax.rsqrt(jnp.maximum(norm_sq, _EPS * _EPS))


# ---------------------------------------------------------------------------
# Kernels
# ---------------------------------------------------------------------------
def gated_kernel(pair_ref, attr_ref, obj_ref, out_ref):
    """apply_gating_fn + L2-normalize on a (tg, Dp) tile of pairs (image independent)."""
    g = (pair_ref[...].astype(jnp.float32)
         + attr_ref[...].astype(jnp.float32)
         + obj_ref[...].astype(jnp.float32)) * (1.0 / 3.0)
    out_ref[...] = _l2_normalize_f32(g).astype(out_ref.dtype)


def vision_score_kernel(img_ref, w_ref, gated_ref, score_ref, acc_ref):
    """Fused: feats = normalize(img @ W) (k-reduction), score = feats @ gated^T.

    img_ref   : (tm, tk)  matmul_dtype
    w_ref     : (tk, Dp)  matmul_dtype
    gated_ref : (Pp, Dp)  matmul_dtype  (full-extent, VMEM resident)
    score_ref : (tm, Pp)  f32           (written only on the last k step)
    acc_ref   : (tm, Dp)  f32 scratch
    """
    k = pl.program_id(1)

    @pl.when(k == 0)
    def _():
        acc_ref[...] = jnp.zeros_like(acc_ref)

    acc_ref[...] += jnp.dot(img_ref[...], w_ref[...],
                            preferred_element_type=jnp.float32)

    @pl.when(k == pl.num_programs(1) - 1)
    def _():
        # eval mode: dropout is identity -> omitted; no logit scale on the pair score
        feats = _l2_normalize_f32(acc_ref[...])                       # (tm, Dp) f32
        score_ref[...] = jax.lax.dot_general(                          # feats @ gated^T
            feats.astype(gated_ref.dtype), gated_ref[...],
            dimension_numbers=(((1,), (1,)), ((), ())),
            preferred_element_type=jnp.float32)


# ---------------------------------------------------------------------------
# Wrappers
# ---------------------------------------------------------------------------
def caila_prepare_gated(pair_embeds, attr_embeds, obj_embeds, all_attrs, all_objs,
                        *, matmul_dtype=jnp.bfloat16, tg=512):
    """Image-independent gated pair embeddings: compute ONCE, cache, reuse per batch.

    Returns (Pp, Dp)-padded, L2-normalized gated embeddings in `matmul_dtype`.
    """
    P, D = pair_embeds.shape
    Dp = _ceil_to(D, 128)
    Pp = _ceil_to(P, 128)
    # largest row-tile <= tg that exactly divides Pp (minimizes padding waste)
    tg = min(tg, Pp)
    tg = 128 * math.gcd(Pp // 128, max(tg // 128, 1))

    # glue: per-pair gather of attr/obj text embeddings (self.all_attrs / self.all_objs)
    attr_g = attr_embeds[all_attrs]
    obj_g = obj_embeds[all_objs]

    # bf16 inputs halve the (one-time) HBM read; the kernel normalizes in f32.
    pair_p = _pad2(pair_embeds.astype(matmul_dtype), Pp, Dp)
    attr_p = _pad2(attr_g.astype(matmul_dtype), Pp, Dp)
    obj_p = _pad2(obj_g.astype(matmul_dtype), Pp, Dp)

    gated = pl.pallas_call(
        gated_kernel,
        out_shape=jax.ShapeDtypeStruct((Pp, Dp), matmul_dtype),
        grid_spec=pltpu.PrefetchScalarGridSpec(
            num_scalar_prefetch=0, grid=(Pp // tg,),
            in_specs=[pl.BlockSpec((tg, Dp), lambda j: (j, 0))] * 3,
            out_specs=pl.BlockSpec((tg, Dp), lambda j: (j, 0))),
        compiler_params=pltpu.CompilerParams(dimension_semantics=("parallel",)),
    )(pair_p, attr_p, obj_p)
    return gated


def caila_eval_scores(img_nchw, w_vision, gated, num_pairs, *,
                      matmul_dtype=jnp.bfloat16, tm=256, tk=2048):
    """CAILA.run() eval branch hot path: (B, num_pairs) pair scores.

    `gated` is the padded output of caila_prepare_gated (cached across batches).
    """
    B = img_nchw.shape[0]
    F_dim = math.prod(int(s) for s in img_nchw.shape[1:])
    D = w_vision.shape[1]
    Pp, Dp = gated.shape
    assert Dp == _ceil_to(D, 128), "gated padding must match w_vision output dim"

    gated = gated.astype(matmul_dtype)

    # --- lane-dense padding (zero padding keeps norms / scores exact) ---
    tk = min(tk, _ceil_to(F_dim, 128))
    Fp = _ceil_to(F_dim, tk)
    row_align = 16 if jnp.dtype(matmul_dtype) == jnp.dtype(jnp.bfloat16) else 8
    Bp = _ceil_to(B, row_align)
    if Bp < tm:
        tm = Bp                      # full-extent batch block (small-B case)
    else:
        Bp = _ceil_to(B, tm)

    img_p = _pad2(img_nchw.reshape(B, -1), Bp, Fp).astype(matmul_dtype)
    w_p = _pad2(w_vision, Fp, Dp).astype(matmul_dtype)

    # Explicit VMEM budget: double-buffered img/W/gated blocks + f32 acc + out.
    itemsize = jnp.dtype(matmul_dtype).itemsize
    vmem_est = (2 * (tm * tk + tk * Dp + Pp * Dp) * itemsize
                + tm * Dp * 4 + 2 * tm * Pp * 4)
    vmem_limit = int(min(max(vmem_est * 3 // 2 + (2 << 20), 32 << 20), 64 << 20))

    score_p = pl.pallas_call(
        vision_score_kernel,
        out_shape=jax.ShapeDtypeStruct((Bp, Pp), jnp.float32),
        grid_spec=pltpu.PrefetchScalarGridSpec(
            num_scalar_prefetch=0, grid=(Bp // tm, Fp // tk),
            in_specs=[pl.BlockSpec((tm, tk), lambda i, k: (i, k)),
                      pl.BlockSpec((tk, Dp), lambda i, k: (k, 0)),
                      pl.BlockSpec((Pp, Dp), lambda i, k: (0, 0))],
            out_specs=pl.BlockSpec((tm, Pp), lambda i, k: (i, 0)),
            scratch_shapes=[pltpu.VMEM((tm, Dp), jnp.float32)]),
        compiler_params=pltpu.CompilerParams(
            dimension_semantics=("parallel", "arbitrary"),
            vmem_limit_bytes=vmem_limit),
    )(img_p, w_p, gated)

    return score_p[:B, :num_pairs]


# ---------------------------------------------------------------------------
# Pure-JAX reference of the eval-path head (f32)
# ---------------------------------------------------------------------------
def _reference(img_nchw, w_vision, pair_embeds, attr_embeds, obj_embeds,
               all_attrs, all_objs):
    B = img_nchw.shape[0]
    img_feats = img_nchw.reshape(B, -1) @ w_vision
    img_feats = img_feats / jnp.maximum(
        jnp.linalg.norm(img_feats, axis=-1, keepdims=True), _EPS)
    gated = jnp.stack(
        [pair_embeds, attr_embeds[all_attrs], obj_embeds[all_objs]], axis=-1
    ).mean(axis=-1)
    gated = gated / jnp.maximum(
        jnp.linalg.norm(gated, axis=-1, keepdims=True), _EPS)
    return img_feats @ gated.T


if __name__ == "__main__":
    key = jax.random.PRNGKey(0)
    k_img, k_w, k_pair, k_attr, k_obj, k_ia, k_io = jax.random.split(key, 7)

    # small synthetic "dataset": 5 attrs, 6 objs, 10 pairs, hidden dim 32
    B, C, H, W = 2, 4, 16, 16
    D = 32
    NUM_ATTRS, NUM_OBJS, NUM_PAIRS = 5, 6, 10

    img = jax.random.normal(k_img, (B, C, H, W), dtype=jnp.float32)      # NCHW
    w_vision = jax.random.normal(k_w, (C * H * W, D), dtype=jnp.float32) * 0.02
    pair_embeds = jax.random.normal(k_pair, (NUM_PAIRS, D), dtype=jnp.float32)
    attr_embeds = jax.random.normal(k_attr, (NUM_ATTRS, D), dtype=jnp.float32)
    obj_embeds = jax.random.normal(k_obj, (NUM_OBJS, D), dtype=jnp.float32)
    # deterministic pair -> (attr, obj) index maps (self.all_attrs / self.all_objs)
    all_attrs = jax.random.randint(k_ia, (NUM_PAIRS,), 0, NUM_ATTRS)
    all_objs = jax.random.randint(k_io, (NUM_PAIRS,), 0, NUM_OBJS)

    ref = _reference(img, w_vision, pair_embeds, attr_embeds, obj_embeds,
                     all_attrs, all_objs)

    # --- bf16 path (default on all generations: v5e / v6e / v7x) ---
    # gated is image independent: prepared ONCE, reused for every image batch.
    gated_bf16 = caila_prepare_gated(pair_embeds, attr_embeds, obj_embeds,
                                     all_attrs, all_objs,
                                     matmul_dtype=jnp.bfloat16)
    scores_bf16 = caila_eval_scores(img, w_vision, gated_bf16, NUM_PAIRS,
                                    matmul_dtype=jnp.bfloat16)
    scores_bf16 = jax.block_until_ready(scores_bf16)
    assert scores_bf16.shape == (B, NUM_PAIRS)
    # bf16 operands cap score accuracy at ~1e-2 relative; fine for argmax ranking.
    assert jnp.allclose(scores_bf16, ref, atol=4e-2, rtol=4e-2)

    # --- f32 path (accuracy option; matches the reference tightly) ---
    gated_f32 = caila_prepare_gated(pair_embeds, attr_embeds, obj_embeds,
                                    all_attrs, all_objs,
                                    matmul_dtype=jnp.float32)
    scores_f32 = caila_eval_scores(img, w_vision, gated_f32, NUM_PAIRS,
                                   matmul_dtype=jnp.float32)
    scores_f32 = jax.block_until_ready(scores_f32)
    assert scores_f32.shape == (B, NUM_PAIRS)
    assert jnp.allclose(scores_f32, ref, atol=1e-4, rtol=1e-4)

    print("KERNEL_OK")
</pallas_src>

<mosaic_0001>
module attributes {stable_mosaic.version = 11 : i64} {
  func.func @gated_kernel(%arg0: i32, %arg1: memref<128x128xbf16, #tpu.memory_space<vmem>>, %arg2: memref<128x128xbf16, #tpu.memory_space<vmem>>, %arg3: memref<128x128xbf16, #tpu.memory_space<vmem>>, %arg4: memref<128x128xbf16, #tpu.memory_space<vmem>>) attributes {dimension_semantics = [#tpu.dimension_semantics<parallel>], iteration_bounds = array<i64: 1>, scalar_prefetch = 0 : i64, scratch_operands = 0 : i64, tpu.core_type = #tpu.core_type<tc>, window_params = [{transform_indices = @transform_0, window_bounds = array<i64: 128, 128>}, {transform_indices = @transform_1, window_bounds = array<i64: 128, 128>}, {transform_indices = @transform_2, window_bounds = array<i64: 128, 128>}, {transform_indices = @transform_3, window_bounds = array<i64: 128, 128>}]} {
    %c0 = arith.constant 0 : index
    %c0_0 = arith.constant 0 : index
    %0 = vector.load %arg1[%c0, %c0_0] : memref<128x128xbf16, #tpu.memory_space<vmem>>, vector<128x128xbf16>
    %1 = arith.extf %0 : vector<128x128xbf16> to vector<128x128xf32>
    %c0_1 = arith.constant 0 : index
    %c0_2 = arith.constant 0 : index
    %2 = vector.load %arg2[%c0_1, %c0_2] : memref<128x128xbf16, #tpu.memory_space<vmem>>, vector<128x128xbf16>
    %3 = arith.extf %2 : vector<128x128xbf16> to vector<128x128xf32>
    %4 = arith.addf %1, %3 : vector<128x128xf32>
    %c0_3 = arith.constant 0 : index
    %c0_4 = arith.constant 0 : index
    %5 = vector.load %arg3[%c0_3, %c0_4] : memref<128x128xbf16, #tpu.memory_space<vmem>>, vector<128x128xbf16>
    %6 = arith.extf %5 : vector<128x128xbf16> to vector<128x128xf32>
    %7 = arith.addf %4, %6 : vector<128x128xf32>
    %cst = arith.constant 0.333333343 : f32
    %8 = vector.broadcast %cst : f32 to vector<128x128xf32>
    %9 = arith.mulf %7, %8 : vector<128x128xf32>
    %10 = arith.mulf %9, %9 : vector<128x128xf32>
    %cst_5 = arith.constant dense<0.000000e+00> : vector<128xf32>
    %11 = vector.multi_reduction <add>, %10, %cst_5 [1] : vector<128x128xf32> to vector<128xf32>
    %12 = vector.shape_cast %11 : vector<128xf32> to vector<128x1xf32>
    %cst_6 = arith.constant 1.000000e-24 : f32
    %13 = vector.broadcast %cst_6 : f32 to vector<128x1xf32>
    %14 = arith.maximumf %12, %13 : vector<128x1xf32>
    %15 = math.rsqrt %14 : vector<128x1xf32>
    %16 = vector.broadcast %15 : vector<128x1xf32> to vector<128x128xf32>
    %17 = arith.mulf %9, %16 : vector<128x128xf32>
    %18 = arith.truncf %17 : vector<128x128xf32> to vector<128x128xbf16>
    %c0_7 = arith.constant 0 : index
    %c0_8 = arith.constant 0 : index
    %19 = vector.load %arg4[%c0_7, %c0_8] : memref<128x128xbf16, #tpu.memory_space<vmem>>, vector<128x128xbf16>
    tpu.vector_store %arg4[%c0_7, %c0_8], %18 {strides = array<i32>} : memref<128x128xbf16, #tpu.memory_space<vmem>>, vector<128x128xbf16>,
    return
  }
  func.func @transform_0(%arg0: i32) -> (i32, i32) {
    %c0_i32 = arith.constant 0 : i32
    %c0_i32_0 = arith.constant 0 : i32
    return %arg0, %c0_i32 : i32, i32
  }
  func.func @transform_1(%arg0: i32) -> (i32, i32) {
    %c0_i32 = arith.constant 0 : i32
    %c0_i32_0 = arith.constant 0 : i32
    return %arg0, %c0_i32 : i32, i32
  }
  func.func @transform_2(%arg0: i32) -> (i32, i32) {
    %c0_i32 = arith.constant 0 : i32
    %c0_i32_0 = arith.constant 0 : i32
    return %arg0, %c0_i32 : i32, i32
  }
  func.func @transform_3(%arg0: i32) -> (i32, i32) {
    %c0_i32 = arith.constant 0 : i32
    %c0_i32_0 = arith.constant 0 : i32
    return %arg0, %c0_i32 : i32, i32
  }
}

</mosaic_0001>

<llo_original>
// kernel: tpu_custom_call.1
$region0: #{tpu_custom_call.1}
  #allocation0 [shape = 'u32[]', space=smem, size = 0x4, offset = 0x4, fixed_abs, tag = 'smem constant byte address 0x4 - core index']
  #allocation1 [shape = 'u32[144,128]{1,0:T(1,128)}', space=vmem, size = 0x12000, scoped, tag = 'internal scratch']
  %s0 = inlined_call_operand.hbm [shape: bf16[128,128], index: 0, kind: input, shape index: {}]
  %s1 = inlined_call_operand.hbm [shape: bf16[128,128], index: 1, kind: input, shape index: {}]
  %s2 = inlined_call_operand.hbm [shape: bf16[128,128], index: 2, kind: input, shape index: {}]
  %s3 = inlined_call_operand.hbm [shape: bf16[128,128], index: 3, kind: output, shape index: {}]
  %s4 = sld [smem:[#allocation0]]
  $region34: #{tpu_custom_call.1} parent=0
    _
  %s6 = ssub.s32 1, %s4
  %s7 = scalar_select 0, %s6, %s4
  $region1: #{tpu_custom_call.1} parent=0
    #allocation2 [shape = 'u8[32768]{0}', space=vmem, size = 0x8000, scoped, tag = 'input window, operand 0, single buffered']
    #allocation3 [shape = 's32[1]{0}', space=sflag, size = 0x4, scoped, tag = 'scoped memory for tpu_custom_call.1']
    #allocation4 [shape = 's32[1]{0}', space=sflag, size = 0x4, scoped, tag = 'scoped memory for tpu_custom_call.1']
    #allocation5 [shape = 'u8[32768]{0}', space=vmem, size = 0x8000, scoped, tag = 'input window, operand 1, single buffered']
    #allocation6 [shape = 's32[1]{0}', space=sflag, size = 0x4, scoped, tag = 'scoped memory for tpu_custom_call.1']
    #allocation7 [shape = 'u8[32768]{0}', space=vmem, size = 0x8000, scoped, tag = 'input window, operand 2, single buffered']
    #allocation8 [shape = 'u8[32768]{0}', space=vmem, size = 0x8000, scoped, tag = 'output window, operand 0, single buffered']
    %8 = vsyncpa [#allocation3], 0
    %9 = vsyncpa [#allocation6], 0
    %10 = vsyncpa [#allocation4], 0
    // Predicated region
    $region2: #{tpu_custom_call.1} parent=1 // pred_check
      _
    $region3: #{tpu_custom_call.1} parent=1 // pred_check_branch
      %12 = sbr.rel (0) target = $region5
    $region4: #{tpu_custom_call.1} parent=1 // pred_region
      %s14 = ssub.s32 1024, 1024
      %15 = vsyncadd [#allocation3], %s14
      %s16 = sshll.u32 [#allocation2], 4
      %s17 = int_to_ptr.vmem [resolvable:$true] %s16
      %22 = dma.hbm_to_vmem [thread:$0]  %s0, 1024, %s17, [#allocation3], 64, 64, 4
    $region5: #{tpu_custom_call.1} parent=1 // pred_fallthru
      _
    // Predicated region
    $region6: #{tpu_custom_call.1} parent=1 // pred_check
      _
    $region7: #{tpu_custom_call.1} parent=1 // pred_check_branch
      %24 = sbr.rel (0) target = $region9
    $region8: #{tpu_custom_call.1} parent=1 // pred_region
      %s26 = ssub.s32 1024, 1024
      %27 = vsyncadd [#allocation6], %s26
      %s28 = sshll.u32 [#allocation5], 4
      %s29 = int_to_ptr.vmem [resolvable:$true] %s28
      %34 = dma.hbm_to_vmem [thread:$0]  %s1, 1024, %s29, [#allocation6], 64, 64, 4
    $region9: #{tpu_custom_call.1} parent=1 // pred_fallthru
      _
    // Predicated region
    $region10: #{tpu_custom_call.1} parent=1 // pred_check
      _
    $region11: #{tpu_custom_call.1} parent=1 // pred_check_branch
      %36 = sbr.rel (0) target = $region13
    $region12: #{tpu_custom_call.1} parent=1 // pred_region
      %s38 = ssub.s32 1024, 1024
      %39 = vsyncadd [#allocation6], %s38
      %s40 = sshll.u32 [#allocation7], 4
      %s41 = int_to_ptr.vmem [resolvable:$true] %s40
      %46 = dma.hbm_to_vmem [thread:$0]  %s2, 1024, %s41, [#allocation6], 64, 64, 4
    $region13: #{tpu_custom_call.1} parent=1 // pred_fallthru
      _
    // Predicated region
    $region14: #{tpu_custom_call.1} parent=1 // pred_check
      _
    $region15: #{tpu_custom_call.1} parent=1 // pred_check_branch
      %48 = sbr.rel (0) target = $region17
    $region16: #{tpu_custom_call.1} parent=1 // pred_region
      %49 = dma.done [#allocation3], 1024
    $region17: #{tpu_custom_call.1} parent=1 // pred_fallthru
      _
    // Predicated region
    $region18: #{tpu_custom_call.1} parent=1 // pred_check
      _
    $region19: #{tpu_custom_call.1} parent=1 // pred_check_branch
      %51 = sbr.rel (0) target = $region21
    $region20: #{tpu_custom_call.1} parent=1 // pred_region
      %52 = dma.done [#allocation6], 1024
    $region21: #{tpu_custom_call.1} parent=1 // pred_fallthru
      _
    // Predicated region
    $region22: #{tpu_custom_call.1} parent=1 // pred_check
      _
    $region23: #{tpu_custom_call.1} parent=1 // pred_check_branch
      %54 = sbr.rel (0) target = $region25
    $region24: #{tpu_custom_call.1} parent=1 // pred_region
      %55 = dma.done [#allocation6], 1024
    $region25: #{tpu_custom_call.1} parent=1 // pred_fallthru
      _
    %v56 = vld [vmem:[#allocation2] sm:$0xf]
    %v57 = vld [vmem:[#allocation2 + $0x4] sm:$0xf]
    %v58 = vld [vmem:[#allocation2 + $0x8] sm:$0xf]
    %v59 = vld [vmem:[#allocation2 + $0xc] sm:$0xf]
    %v60 = vld [vmem:[#allocation2 + $0x10] sm:$0xf]
    %v61 = vld [vmem:[#allocation2 + $0x14] sm:$0xf]
    %v62 = vld [vmem:[#allocation2 + $0x18] sm:$0xf]
    %v63 = vld [vmem:[#allocation2 + $0x1c] sm:$0xf]
    %v64 = vld [vmem:[#allocation2 + $0x20] sm:$0xf]
    %v65 = vld [vmem:[#allocation2 + $0x24] sm:$0xf]
    %v66 = vld [vmem:[#allocation2 + $0x28] sm:$0xf]
    %v67 = vld [vmem:[#allocation2 + $0x2c] sm:$0xf]
    %v68 = vld [vmem:[#allocation2 + $0x30] sm:$0xf]
    %v69 = vld [vmem:[#allocation2 + $0x34] sm:$0xf]
    %v70 = vld [vmem:[#allocation2 + $0x38] sm:$0xf]
    %v71 = vld [vmem:[#allocation2 + $0x3c] sm:$0xf]
    %v72 = vunpack.c.l.bf16 %v56
    %v73 = vunpack.c.l.bf16 %v57
    %v74 = vunpack.c.l.bf16 %v58
    %v75 = vunpack.c.l.bf16 %v59
    %v76 = vunpack.c.l.bf16 %v60
    %v77 = vunpack.c.l.bf16 %v61
    %v78 = vunpack.c.l.bf16 %v62
    %v79 = vunpack.c.l.bf16 %v63
    %v80 = vunpack.c.l.bf16 %v64
    %v81 = vunpack.c.l.bf16 %v65
    %v82 = vunpack.c.l.bf16 %v66
    %v83 = vunpack.c.l.bf16 %v67
    %v84 = vunpack.c.l.bf16 %v68
    %v85 = vunpack.c.l.bf16 %v69
    %v86 = vunpack.c.l.bf16 %v70
    %v87 = vunpack.c.l.bf16 %v71
    %v88 = vld [vmem:[#allocation5] sm:$0xf]
    %v89 = vld [vmem:[#allocation5 + $0x4] sm:$0xf]
    %v90 = vld [vmem:[#allocation5 + $0x8] sm:$0xf]
    %v91 = vld [vmem:[#allocation5 + $0xc] sm:$0xf]
    %v92 = vld [vmem:[#allocation5 + $0x10] sm:$0xf]
    %v93 = vld [vmem:[#allocation5 + $0x14] sm:$0xf]
    %v94 = vld [vmem:[#allocation5 + $0x18] sm:$0xf]
    %v95 = vld [vmem:[#allocation5 + $0x1c] sm:$0xf]
    %v96 = vld [vmem:[#allocation5 + $0x20] sm:$0xf]
    %v97 = vld [vmem:[#allocation5 + $0x24] sm:$0xf]
    %v98 = vld [vmem:[#allocation5 + $0x28] sm:$0xf]
    %v99 = vld [vmem:[#allocation5 + $0x2c] sm:$0xf]
    %v100 = vld [vmem:[#allocation5 + $0x30] sm:$0xf]
    %v101 = vld [vmem:[#allocation5 + $0x34] sm:$0xf]
    %v102 = vld [vmem:[#allocation5 + $0x38] sm:$0xf]
    %v103 = vld [vmem:[#allocation5 + $0x3c] sm:$0xf]
    %v104 = vunpack.c.l.bf16 %v88
    %v105 = vunpack.c.l.bf16 %v89
    %v106 = vunpack.c.l.bf16 %v90
    %v107 = vunpack.c.l.bf16 %v91
    %v108 = vunpack.c.l.bf16 %v92
    %v109 = vunpack.c.l.bf16 %v93
    %v110 = vunpack.c.l.bf16 %v94
    %v111 = vunpack.c.l.bf16 %v95
    %v112 = vunpack.c.l.bf16 %v96
    %v113 = vunpack.c.l.bf16 %v97
    %v114 = vunpack.c.l.bf16 %v98
    %v115 = vunpack.c.l.bf16 %v99
    %v116 = vunpack.c.l.bf16 %v100
    %v117 = vunpack.c.l.bf16 %v101
    %v118 = vunpack.c.l.bf16 %v102
    %v119 = vunpack.c.l.bf16 %v103
    %v120 = vadd.f32 %v72, %v104
    %v121 = vadd.f32 %v73, %v105
    %v122 = vadd.f32 %v74, %v106
    %v123 = vadd.f32 %v75, %v107
    %v124 = vadd.f32 %v76, %v108
    %v125 = vadd.f32 %v77, %v109
    %v126 = vadd.f32 %v78, %v110
    %v127 = vadd.f32 %v79, %v111
    %v128 = vadd.f32 %v80, %v112
    %v129 = vadd.f32 %v81, %v113
    %v130 = vadd.f32 %v82, %v114
    %v131 = vadd.f32 %v83, %v115
    %v132 = vadd.f32 %v84, %v116
    %v133 = vadd.f32 %v85, %v117
    %v134 = vadd.f32 %v86, %v118
    %v135 = vadd.f32 %v87, %v119
    %v136 = vld [vmem:[#allocation7] sm:$0xf]
    %v137 = vld [vmem:[#allocation7 + $0x4] sm:$0xf]
    %v138 = vld [vmem:[#allocation7 + $0x8] sm:$0xf]
    %v139 = vld [vmem:[#allocation7 + $0xc] sm:$0xf]
    %v140 = vld [vmem:[#allocation7 + $0x10] sm:$0xf]
    %v141 = vld [vmem:[#allocation7 + $0x14] sm:$0xf]
    %v142 = vld [vmem:[#allocation7 + $0x18] sm:$0xf]
    %v143 = vld [vmem:[#allocation7 + $0x1c] sm:$0xf]
    %v144 = vld [vmem:[#allocation7 + $0x20] sm:$0xf]
    %v145 = vld [vmem:[#allocation7 + $0x24] sm:$0xf]
    %v146 = vld [vmem:[#allocation7 + $0x28] sm:$0xf]
    %v147 = vld [vmem:[#allocation7 + $0x2c] sm:$0xf]
    %v148 = vld [vmem:[#allocation7 + $0x30] sm:$0xf]
    %v149 = vld [vmem:[#allocation7 + $0x34] sm:$0xf]
    %v150 = vld [vmem:[#allocation7 + $0x38] sm:$0xf]
    %v151 = vld [vmem:[#allocation7 + $0x3c] sm:$0xf]
    %v152 = vunpack.c.l.bf16 %v136
    %v153 = vunpack.c.l.bf16 %v137
    %v154 = vunpack.c.l.bf16 %v138
    %v155 = vunpack.c.l.bf16 %v139
    %v156 = vunpack.c.l.bf16 %v140
    %v157 = vunpack.c.l.bf16 %v141
    %v158 = vunpack.c.l.bf16 %v142
    %v159 = vunpack.c.l.bf16 %v143
    %v160 = vunpack.c.l.bf16 %v144
    %v161 = vunpack.c.l.bf16 %v145
    %v162 = vunpack.c.l.bf16 %v146
    %v163 = vunpack.c.l.bf16 %v147
    %v164 = vunpack.c.l.bf16 %v148
    %v165 = vunpack.c.l.bf16 %v149
    %v166 = vunpack.c.l.bf16 %v150
    %v167 = vunpack.c.l.bf16 %v151
    %v168 = vadd.f32 %v120, %v152
    %v169 = vadd.f32 %v121, %v153
    %v170 = vadd.f32 %v122, %v154
    %v171 = vadd.f32 %v123, %v155
    %v172 = vadd.f32 %v124, %v156
    %v173 = vadd.f32 %v125, %v157
    %v174 = vadd.f32 %v126, %v158
    %v175 = vadd.f32 %v127, %v159
    %v176 = vadd.f32 %v128, %v160
    %v177 = vadd.f32 %v129, %v161
    %v178 = vadd.f32 %v130, %v162
    %v179 = vadd.f32 %v131, %v163
    %v180 = vadd.f32 %v132, %v164
    %v181 = vadd.f32 %v133, %v165
    %v182 = vadd.f32 %v134, %v166
    %v183 = vadd.f32 %v135, %v167
    %v184 = vmul.f32 %v168, 0.33333334
    %v185 = vmul.f32 %v169, 0.33333334
    %v186 = vmul.f32 %v170, 0.33333334
    %v187 = vmul.f32 %v171, 0.33333334
    %v188 = vmul.f32 %v172, 0.33333334
    %v189 = vmul.f32 %v173, 0.33333334
    %v190 = vmul.f32 %v174, 0.33333334
    %v191 = vmul.f32 %v175, 0.33333334
    %v192 = vmul.f32 %v176, 0.33333334
    %v193 = vmul.f32 %v177, 0.33333334
    %v194 = vmul.f32 %v178, 0.33333334
    %v195 = vmul.f32 %v179, 0.33333334
    %v196 = vmul.f32 %v180, 0.33333334
    %v197 = vmul.f32 %v181, 0.33333334
    %v198 = vmul.f32 %v182, 0.33333334
    %v199 = vmul.f32 %v183, 0.33333334
    %v200 = vmul.f32 %v184, %v184
    %v201 = vmul.f32 %v185, %v185
    %v202 = vmul.f32 %v186, %v186
    %v203 = vmul.f32 %v187, %v187
    %v204 = vmul.f32 %v188, %v188
    %v205 = vmul.f32 %v189, %v189
    %v206 = vmul.f32 %v190, %v190
    %v207 = vmul.f32 %v191, %v191
    %v208 = vmul.f32 %v192, %v192
    %v209 = vmul.f32 %v193, %v193
    %v210 = vmul.f32 %v194, %v194
    %v211 = vmul.f32 %v195, %v195
    %v212 = vmul.f32 %v196, %v196
    %v213 = vmul.f32 %v197, %v197
    %v214 = vmul.f32 %v198, %v198
    %v215 = vmul.f32 %v199, %v199
    %216 = vadd.xlane.f32.xlu0 %v200
    %v217 = vpop.xlane.xlu0 %216
    %218 = vadd.xlane.f32.xlu0 %v201
    %v219 = vpop.xlane.xlu0 %218
    %220 = vadd.xlane.f32.xlu0 %v202
    %v221 = vpop.xlane.xlu0 %220
    %222 = vadd.xlane.f32.xlu0 %v203
    %v223 = vpop.xlane.xlu0 %222
    %224 = vadd.xlane.f32.xlu0 %v204
    %v225 = vpop.xlane.xlu0 %224
    %226 = vadd.xlane.f32.xlu0 %v205
    %v227 = vpop.xlane.xlu0 %226
    %228 = vadd.xlane.f32.xlu0 %v206
    %v229 = vpop.xlane.xlu0 %228
    %230 = vadd.xlane.f32.xlu0 %v207
    %v231 = vpop.xlane.xlu0 %230
    %232 = vadd.xlane.f32.xlu0 %v208
    %v233 = vpop.xlane.xlu0 %232
    %234 = vadd.xlane.f32.xlu0 %v209
    %v235 = vpop.xlane.xlu0 %234
    %236 = vadd.xlane.f32.xlu0 %v210
    %v237 = vpop.xlane.xlu0 %236
    %238 = vadd.xlane.f32.xlu0 %v211
    %v239 = vpop.xlane.xlu0 %238
    %240 = vadd.xlane.f32.xlu0 %v212
    %v241 = vpop.xlane.xlu0 %240
    %242 = vadd.xlane.f32.xlu0 %v213
    %v243 = vpop.xlane.xlu0 %242
    %244 = vadd.xlane.f32.xlu0 %v214
    %v245 = vpop.xlane.xlu0 %244
    %246 = vadd.xlane.f32.xlu0 %v215
    %v247 = vpop.xlane.xlu0 %246
    %v248 = vmax.f32 %v217, 1e-24
    %v249 = vmax.f32 %v219, 1e-24
    %v250 = vmax.f32 %v221, 1e-24
    %v251 = vmax.f32 %v223, 1e-24
    %v252 = vmax.f32 %v225, 1e-24
    %v253 = vmax.f32 %v227, 1e-24
    %v254 = vmax.f32 %v229, 1e-24
    %v255 = vmax.f32 %v231, 1e-24
    %v256 = vmax.f32 %v233, 1e-24
    %v257 = vmax.f32 %v235, 1e-24
    %v258 = vmax.f32 %v237, 1e-24
    %v259 = vmax.f32 %v239, 1e-24
    %v260 = vmax.f32 %v241, 1e-24
    %v261 = vmax.f32 %v243, 1e-24
    %v262 = vmax.f32 %v245, 1e-24
    %v263 = vmax.f32 %v247, 1e-24
    %v264 = vrsqrt.pop %v248
    %v265 = vrsqrt.pop %v249
    %v266 = vrsqrt.pop %v250
    %v267 = vrsqrt.pop %v251
    %v268 = vrsqrt.pop %v252
    %v269 = vrsqrt.pop %v253
    %v270 = vrsqrt.pop %v254
    %v271 = vrsqrt.pop %v255
    %v272 = vrsqrt.pop %v256
    %v273 = vrsqrt.pop %v257
    %v274 = vrsqrt.pop %v258
    %v275 = vrsqrt.pop %v259
    %v276 = vrsqrt.pop %v260
    %v277 = vrsqrt.pop %v261
    %v278 = vrsqrt.pop %v262
    %v279 = vrsqrt.pop %v263
    %v280 = vmul.f32 %v184, %v264
    %v281 = vmul.f32 %v185, %v265
    %v282 = vmul.f32 %v186, %v266
    %v283 = vmul.f32 %v187, %v267
    %v284 = vmul.f32 %v188, %v268
    %v285 = vmul.f32 %v189, %v269
    %v286 = vmul.f32 %v190, %v270
    %v287 = vmul.f32 %v191, %v271
    %v288 = vmul.f32 %v192, %v272
    %v289 = vmul.f32 %v193, %v273
    %v290 = vmul.f32 %v194, %v274
    %v291 = vmul.f32 %v195, %v275
    %v292 = vmul.f32 %v196, %v276
    %v293 = vmul.f32 %v197, %v277
    %v294 = vmul.f32 %v198, %v278
    %v295 = vmul.f32 %v199, %v279
    %v296 = vpack.c.bf16 %v281, %v280
    %v297 = vpack.c.bf16 %v283, %v282
    %v298 = vpack.c.bf16 %v285, %v284
    %v299 = vpack.c.bf16 %v287, %v286
    %v300 = vpack.c.bf16 %v289, %v288
    %v301 = vpack.c.bf16 %v291, %v290
    %v302 = vpack.c.bf16 %v293, %v292
    %v303 = vpack.c.bf16 %v295, %v294
    %v312 = vunpack.c.l.b16 %v296
    %v313 = vunpack.c.h.b16 %v296
    %v314 = vunpack.c.l.b16 %v297
    %v315 = vunpack.c.h.b16 %v297
    %v316 = vunpack.c.l.b16 %v298
    %v317 = vunpack.c.h.b16 %v298
    %v318 = vunpack.c.l.b16 %v299
    %v319 = vunpack.c.h.b16 %v299
    %v320 = vunpack.c.l.b16 %v300
    %v321 = vunpack.c.h.b16 %v300
    %v322 = vunpack.c.l.b16 %v301
    %v323 = vunpack.c.h.b16 %v301
    %v324 = vunpack.c.l.b16 %v302
    %v325 = vunpack.c.h.b16 %v302
    %v326 = vunpack.c.l.b16 %v303
    %v327 = vunpack.c.h.b16 %v303
    %v328 = vpack.c.b16 %v312, %v312
    %v329 = vpack.c.b16 %v313, %v313
    %v330 = vpack.c.b16 %v314, %v314
    %v331 = vpack.c.b16 %v315, %v315
    %v332 = vpack.c.b16 %v316, %v316
    %v333 = vpack.c.b16 %v317, %v317
    %v334 = vpack.c.b16 %v318, %v318
    %v335 = vpack.c.b16 %v319, %v319
    %v336 = vpack.c.b16 %v320, %v320
    %v337 = vpack.c.b16 %v321, %v321
    %v338 = vpack.c.b16 %v322, %v322
    %v339 = vpack.c.b16 %v323, %v323
    %v340 = vpack.c.b16 %v324, %v324
    %v341 = vpack.c.b16 %v325, %v325
    %v342 = vpack.c.b16 %v326, %v326
    %v343 = vpack.c.b16 %v327, %v327
    %360 = vst [vmem:[#allocation8] sm:$0xf] %v328
    %361 = vst [vmem:[#allocation8 + $0x4] sm:$0xf] %v329
    %362 = vst [vmem:[#allocation8 + $0x8] sm:$0xf] %v330
    %363 = vst [vmem:[#allocation8 + $0xc] sm:$0xf] %v331
    %364 = vst [vmem:[#allocation8 + $0x10] sm:$0xf] %v332
    %365 = vst [vmem:[#allocation8 + $0x14] sm:$0xf] %v333
    %366 = vst [vmem:[#allocation8 + $0x18] sm:$0xf] %v334
    %367 = vst [vmem:[#allocation8 + $0x1c] sm:$0xf] %v335
    %368 = vst [vmem:[#allocation8 + $0x20] sm:$0xf] %v336
    %369 = vst [vmem:[#allocation8 + $0x24] sm:$0xf] %v337
    %370 = vst [vmem:[#allocation8 + $0x28] sm:$0xf] %v338
    %371 = vst [vmem:[#allocation8 + $0x2c] sm:$0xf] %v339
    %372 = vst [vmem:[#allocation8 + $0x30] sm:$0xf] %v340
    %373 = vst [vmem:[#allocation8 + $0x34] sm:$0xf] %v341
    %374 = vst [vmem:[#allocation8 + $0x38] sm:$0xf] %v342
    %375 = vst [vmem:[#allocation8 + $0x3c] sm:$0xf] %v343
    // Predicated region
    $region26: #{tpu_custom_call.1} parent=1 // pred_check
      _
    $region27: #{tpu_custom_call.1} parent=1 // pred_check_branch
      %377 = sbr.rel (0) target = $region29
    $region28: #{tpu_custom_call.1} parent=1 // pred_region
      %s379 = ssub.s32 1024, 1024
      %380 = vsyncadd [#allocation4], %s379
      %s381 = sshll.u32 [#allocation8], 4
      %s382 = int_to_ptr.vmem [resolvable:$true] %s381
      %387 = dma.vmem_to_hbm [thread:$0]  %s382, 1024, %s3, [#allocation4], 64, 64, 4
    $region29: #{tpu_custom_call.1} parent=1 // pred_fallthru
      _
    // Predicated region
    $region30: #{tpu_custom_call.1} parent=1 // pred_check
      _
    $region31: #{tpu_custom_call.1} parent=1 // pred_check_branch
      %389 = sbr.rel (0) target = $region33
    $region32: #{tpu_custom_call.1} parent=1 // pred_region
      %390 = dma.done [#allocation4], 1024
    $region33: #{tpu_custom_call.1} parent=1 // pred_fallthru
      _
    %391 = vsyncpa [#allocation3], 1
    %392 = vsyncpa [#allocation6], 1
    %393 = vsyncpa [#allocation4], 1

</llo_original>
